<compile_context>
chip_gen: v7x
topology: tpu7x:2x2x1
jax: 0.10.0
libtpu: 0.0.40
codegen_flags: <defaults>
</compile_context>

<pallas_src>
import jax
import jax.numpy as jnp
from jax.experimental import pallas as pl
from jax.experimental.pallas import tpu as pltpu

EPS = 1e-8


def _dice_partial_kernel(logits_ref, labels_ref, inter_ref, card_ref, acc_ref):
    # logits_ref: (1, C, TS) native dtype; labels_ref: (1, 1, TS) int
    # inter_ref / card_ref: (1, 1, 128) f32 outputs (per (b, g) partial sums)
    # acc_ref: SMEM (2,) f32 scratch: [intersection, cardinality]
    t = pl.program_id(2)

    @pl.when(t == 0)
    def _init():
        acc_ref[0] = jnp.float32(0.0)
        acc_ref[1] = jnp.float32(0.0)

    x = logits_ref[0].astype(jnp.float32)          # (C, TS) f32
    lbl = labels_ref[0].astype(jnp.int32)          # (1, TS) i32
    C, TS = x.shape

    # Numerically stable softmax over the class (sublane) axis.
    m = jnp.max(x, axis=0, keepdims=True)          # (1, TS)
    e = jnp.exp(x - m)                             # (C, TS)  (EUP)
    denom = jnp.sum(e, axis=0, keepdims=True)      # (1, TS)
    inv = pl.reciprocal(denom, approx=True)        # EUP vrcp (own VLIW slot)
    inv = inv * (2.0 - denom * inv)                # one Newton step -> ~f32 exact

    fg = (lbl != 0).astype(jnp.float32)            # (1, TS) foreground mask
    cls = jax.lax.broadcasted_iota(jnp.int32, (C, TS), 0)

    # intersection: sum_s p[label_s, s] over foreground pixels
    e_at_lbl = jnp.sum(jnp.where(cls == lbl, e, 0.0), axis=0, keepdims=True)  # (1, TS)
    inter_tile = jnp.sum(e_at_lbl * inv * fg)

    # cardinality: sum_s sum_{c>=1}(p + onehot) = TS - sum_s p0 + #foreground
    p0 = e[0:1, :] * inv                           # (1, TS) background prob
    card_tile = jnp.float32(TS) - jnp.sum(p0) + jnp.sum(fg)

    acc_ref[0] = acc_ref[0] + inter_tile
    acc_ref[1] = acc_ref[1] + card_tile

    @pl.when(t == pl.num_programs(2) - 1)
    def _finalize():
        inter_ref[...] = jnp.full(inter_ref.shape, acc_ref[0], dtype=inter_ref.dtype)
        card_ref[...] = jnp.full(card_ref.shape, acc_ref[1], dtype=card_ref.dtype)


def _choose_ts(S, C):
    """Largest spatial tile (multiple of 128 dividing S) whose f32 logits
    working set stays under ~1 MiB, capped at 32768 lanes."""
    if S % 128 != 0 or S <= 128:
        return S                                   # single full-S tile (allowed)
    n = S // 128
    max_elems = 256 * 1024                         # C*TS f32 <= 1 MiB
    k_cap = max(1, min(n, max_elems // (128 * max(C, 1)), 32768 // 128))
    k = k_cap
    while n % k != 0:
        k -= 1
    return 128 * k


def dice_loss(logits, labels):
    """logits: (B, C, H, W) float (f32 or bf16); labels: (B, H, W) int -> scalar."""
    B, C, H, W = logits.shape
    S = H * W

    x = logits.reshape(B, C, S)                    # keep native dtype (no upcast)
    lbl = labels.reshape(B, 1, S)
    if jnp.dtype(lbl.dtype).itemsize > 4:          # TPU has no int64
        lbl = lbl.astype(jnp.int32)

    TS = _choose_ts(S, C)
    n_tiles = S // TS
    G = 2 if (n_tiles >= 2 and n_tiles % 2 == 0 and B < 4) else 1
    T = n_tiles // G                               # reduction steps per group

    def in_map(b, g, t):
        return (b, 0, g * T + t)

    def out_map(b, g, t):
        return (b * G + g, 0, 0)

    bytes_accessed = int(x.size * x.dtype.itemsize
                         + lbl.size * lbl.dtype.itemsize
                         + 2 * B * G * 128 * 4)
    cost = pl.CostEstimate(flops=8 * B * C * S,
                           transcendentals=B * C * S,
                           bytes_accessed=bytes_accessed)

    inter_out, card_out = pl.pallas_call(
        _dice_partial_kernel,
        out_shape=(jax.ShapeDtypeStruct((B * G, 1, 128), jnp.float32),
                   jax.ShapeDtypeStruct((B * G, 1, 128), jnp.float32)),
        grid_spec=pltpu.PrefetchScalarGridSpec(
            num_scalar_prefetch=0,
            grid=(B, G, T),
            in_specs=[pl.BlockSpec((1, C, TS), in_map),
                      pl.BlockSpec((1, 1, TS), in_map)],
            out_specs=[pl.BlockSpec((1, 1, 128), out_map),
                       pl.BlockSpec((1, 1, 128), out_map)],
            scratch_shapes=[pltpu.SMEM((2,), jnp.float32)]),
        compiler_params=pltpu.CompilerParams(
            dimension_semantics=("parallel", "parallel", "arbitrary")),
        cost_estimate=cost,
    )(x, lbl)

    # Tiny JAX epilogue: sum per-group partials, per-sample dice, batch mean.
    inter = inter_out[:, 0, 0].reshape(B, G).sum(axis=1)
    card = card_out[:, 0, 0].reshape(B, G).sum(axis=1)
    dice = (2.0 * inter + EPS) / (card + EPS)
    return jnp.mean(1.0 - dice)


def _reference(logits, labels):
    """Pure-JAX reference matching the PyTorch forward (f32)."""
    B, C, H, W = logits.shape
    p = jax.nn.softmax(logits.astype(jnp.float32), axis=1)
    oh = jax.nn.one_hot(labels, C, axis=1, dtype=jnp.float32)
    p = p[:, 1:]
    oh = oh[:, 1:]
    inter = jnp.sum(p * oh, axis=(1, 2, 3))
    card = jnp.sum(p + oh, axis=(1, 2, 3))
    dice = (2.0 * inter + EPS) / (card + EPS)
    return jnp.mean(1.0 - dice)


if __name__ == "__main__":
    key = jax.random.PRNGKey(0)
    k1, k2 = jax.random.split(key)
    B, C, H, W = 2, 4, 16, 16
    logits = jax.random.normal(k1, (B, C, H, W), dtype=jnp.float32)
    labels = jax.random.randint(k2, (B, H, W), 0, C, dtype=jnp.int32)

    loss = jax.jit(dice_loss)(logits, labels)
    jax.block_until_ready(loss)

    ref = _reference(logits, labels)
    assert jnp.allclose(loss, ref, rtol=5e-5, atol=1e-6), (loss, ref)

    print("KERNEL_OK")
</pallas_src>

<mosaic_0001>
module attributes {stable_mosaic.version = 11 : i64} {
  func.func @_dice_partial_kernel(%arg0: i32, %arg1: i32, %arg2: i32, %arg3: memref<1x4x256xf32, #tpu.memory_space<vmem>>, %arg4: memref<1x1x256xi32, #tpu.memory_space<vmem>>, %arg5: memref<1x1x128xf32, #tpu.memory_space<vmem>>, %arg6: memref<1x1x128xf32, #tpu.memory_space<vmem>>, %arg7: memref<2xf32, #tpu.memory_space<smem>>) attributes {dimension_semantics = [#tpu.dimension_semantics<parallel>, #tpu.dimension_semantics<parallel>, #tpu.dimension_semantics<arbitrary>], iteration_bounds = array<i64: 2, 1, 1>, scalar_prefetch = 0 : i64, scratch_operands = 1 : i64, tpu.core_type = #tpu.core_type<tc>, window_params = [{transform_indices = @transform_0, window_bounds = array<i64: 1, 4, 256>}, {transform_indices = @transform_1, window_bounds = array<i64: 1, 1, 256>}, {transform_indices = @transform_2, window_bounds = array<i64: 1, 1, 128>}, {transform_indices = @transform_3, window_bounds = array<i64: 1, 1, 128>}]} {
    %c0_i32 = arith.constant 0 : i32
    %0 = arith.cmpi eq, %arg2, %c0_i32 : i32
    %1 = arith.extui %0 : i1 to i32
    %c0_i32_0 = arith.constant 0 : i32
    %2 = arith.cmpi ne, %1, %c0_i32_0 : i32
    scf.if %2 {
      %cst_20 = arith.constant 0.000000e+00 : f32
      %c0_21 = arith.constant 0 : index
      %57 = memref.load %arg7[%c0_21] : memref<2xf32, #tpu.memory_space<smem>>
      memref.store %cst_20, %arg7[%c0_21] : memref<2xf32, #tpu.memory_space<smem>>
      %cst_22 = arith.constant 0.000000e+00 : f32
      %c1_23 = arith.constant 1 : index
      %58 = memref.load %arg7[%c1_23] : memref<2xf32, #tpu.memory_space<smem>>
      memref.store %cst_22, %arg7[%c1_23] : memref<2xf32, #tpu.memory_space<smem>>
    } else {
    }
    %c0 = arith.constant 0 : index
    %c0_1 = arith.constant 0 : index
    %c0_2 = arith.constant 0 : index
    %3 = vector.load %arg3[%c0, %c0_1, %c0_2] : memref<1x4x256xf32, #tpu.memory_space<vmem>>, vector<1x4x256xf32>
    %4 = vector.shape_cast %3 : vector<1x4x256xf32> to vector<4x256xf32>
    %c0_3 = arith.constant 0 : index
    %c0_4 = arith.constant 0 : index
    %c0_5 = arith.constant 0 : index
    %5 = vector.load %arg4[%c0_3, %c0_4, %c0_5] : memref<1x1x256xi32, #tpu.memory_space<vmem>>, vector<1x1x256xi32>
    %6 = vector.shape_cast %5 : vector<1x1x256xi32> to vector<1x256xi32>
    %cst = arith.constant dense<0xFF800000> : vector<256xf32>
    %7 = vector.multi_reduction <maximumf>, %4, %cst [0] : vector<4x256xf32> to vector<256xf32>
    %8 = vector.shape_cast %7 : vector<256xf32> to vector<1x256xf32>
    %9 = vector.broadcast %8 : vector<1x256xf32> to vector<4x256xf32>
    %10 = arith.subf %4, %9 : vector<4x256xf32>
    %11 = math.exp %10 : vector<4x256xf32>
    %cst_6 = arith.constant dense<0.000000e+00> : vector<256xf32>
    %12 = vector.multi_reduction <add>, %11, %cst_6 [0] : vector<4x256xf32> to vector<256xf32>
    %13 = vector.shape_cast %12 : vector<256xf32> to vector<1x256xf32>
    %14 = tpu.reciprocal %13 {approx = true} : vector<1x256xf32> -> vector<1x256xf32>
    %15 = arith.mulf %13, %14 : vector<1x256xf32>
    %cst_7 = arith.constant 2.000000e+00 : f32
    %16 = vector.broadcast %cst_7 : f32 to vector<1x256xf32>
    %17 = arith.subf %16, %15 : vector<1x256xf32>
    %18 = arith.mulf %14, %17 : vector<1x256xf32>
    %c0_i32_8 = arith.constant 0 : i32
    %19 = vector.broadcast %c0_i32_8 : i32 to vector<1x256xi32>
    %20 = arith.cmpi ne, %6, %19 : vector<1x256xi32>
    %21 = arith.extui %20 : vector<1x256xi1> to vector<1x256xi32>
    %22 = arith.sitofp %21 : vector<1x256xi32> to vector<1x256xf32>
    %23 = tpu.iota {dimensions = array<i32: 0>} : vector<4x256xi32>
    %24 = vector.broadcast %6 : vector<1x256xi32> to vector<4x256xi32>
    %25 = arith.cmpi eq, %23, %24 : vector<4x256xi32>
    %cst_9 = arith.constant 0.000000e+00 : f32
    %26 = vector.broadcast %cst_9 : f32 to vector<4x256xf32>
    %27 = arith.select %25, %11, %26 : vector<4x256xi1>, vector<4x256xf32>
    %cst_10 = arith.constant dense<0.000000e+00> : vector<256xf32>
    %28 = vector.multi_reduction <add>, %27, %cst_10 [0] : vector<4x256xf32> to vector<256xf32>
    %29 = vector.shape_cast %28 : vector<256xf32> to vector<1x256xf32>
    %30 = arith.mulf %29, %18 : vector<1x256xf32>
    %31 = arith.mulf %30, %22 : vector<1x256xf32>
    %32 = vector.shape_cast %31 : vector<1x256xf32> to vector<1x1x256xf32>
    %cst_11 = arith.constant dense<0.000000e+00> : vector<1xf32>
    %33 = vector.multi_reduction <add>, %32, %cst_11 [1, 2] : vector<1x1x256xf32> to vector<1xf32>
    %34 = vector.shape_cast %33 : vector<1xf32> to vector<1x1x1xf32>
    %35 = vector.extract %34[0, 0, 0] : f32 from vector<1x1x1xf32>
    %36 = vector.extract_strided_slice %11 {offsets = [0, 0], sizes = [1, 256], strides = [1, 1]} : vector<4x256xf32> to vector<1x256xf32>
    %37 = arith.mulf %36, %18 : vector<1x256xf32>
    %38 = vector.shape_cast %37 : vector<1x256xf32> to vector<1x1x256xf32>
    %cst_12 = arith.constant dense<0.000000e+00> : vector<1xf32>
    %39 = vector.multi_reduction <add>, %38, %cst_12 [1, 2] : vector<1x1x256xf32> to vector<1xf32>
    %40 = vector.shape_cast %39 : vector<1xf32> to vector<1x1x1xf32>
    %41 = vector.extract %40[0, 0, 0] : f32 from vector<1x1x1xf32>
    %cst_13 = arith.constant 2.560000e+02 : f32
    %42 = arith.subf %cst_13, %41 : f32
    %43 = vector.shape_cast %22 : vector<1x256xf32> to vector<1x1x256xf32>
    %cst_14 = arith.constant dense<0.000000e+00> : vector<1xf32>
    %44 = vector.multi_reduction <add>, %43, %cst_14 [1, 2] : vector<1x1x256xf32> to vector<1xf32>
    %45 = vector.shape_cast %44 : vector<1xf32> to vector<1x1x1xf32>
    %46 = vector.extract %45[0, 0, 0] : f32 from vector<1x1x1xf32>
    %47 = arith.addf %42, %46 : f32
    %c0_15 = arith.constant 0 : index
    %48 = memref.load %arg7[%c0_15] : memref<2xf32, #tpu.memory_space<smem>>
    %49 = arith.addf %48, %35 : f32
    %c0_16 = arith.constant 0 : index
    %50 = memref.load %arg7[%c0_16] : memref<2xf32, #tpu.memory_space<smem>>
    memref.store %49, %arg7[%c0_16] : memref<2xf32, #tpu.memory_space<smem>>
    %c1 = arith.constant 1 : index
    %51 = memref.load %arg7[%c1] : memref<2xf32, #tpu.memory_space<smem>>
    %52 = arith.addf %51, %47 : f32
    %c1_17 = arith.constant 1 : index
    %53 = memref.load %arg7[%c1_17] : memref<2xf32, #tpu.memory_space<smem>>
    memref.store %52, %arg7[%c1_17] : memref<2xf32, #tpu.memory_space<smem>>
    %c0_i32_18 = arith.constant 0 : i32
    %54 = arith.cmpi eq, %arg2, %c0_i32_18 : i32
    %55 = arith.extui %54 : i1 to i32
    %c0_i32_19 = arith.constant 0 : i32
    %56 = arith.cmpi ne, %55, %c0_i32_19 : i32
    scf.if %56 {
      %c0_20 = arith.constant 0 : index
      %57 = memref.load %arg7[%c0_20] : memref<2xf32, #tpu.memory_space<smem>>
      %58 = vector.broadcast %57 : f32 to vector<1x1x128xf32>
      %c0_21 = arith.constant 0 : index
      %c0_22 = arith.constant 0 : index
      %c0_23 = arith.constant 0 : index
      %59 = vector.load %arg5[%c0_21, %c0_22, %c0_23] : memref<1x1x128xf32, #tpu.memory_space<vmem>>, vector<1x1x128xf32>
      tpu.vector_store %arg5[%c0_21, %c0_22, %c0_23], %58 {strides = array<i32>} : memref<1x1x128xf32, #tpu.memory_space<vmem>>, vector<1x1x128xf32>,
      %c1_24 = arith.constant 1 : index
      %60 = memref.load %arg7[%c1_24] : memref<2xf32, #tpu.memory_space<smem>>
      %61 = vector.broadcast %60 : f32 to vector<1x1x128xf32>
      %c0_25 = arith.constant 0 : index
      %c0_26 = arith.constant 0 : index
      %c0_27 = arith.constant 0 : index
      %62 = vector.load %arg6[%c0_25, %c0_26, %c0_27] : memref<1x1x128xf32, #tpu.memory_space<vmem>>, vector<1x1x128xf32>
      tpu.vector_store %arg6[%c0_25, %c0_26, %c0_27], %61 {strides = array<i32>} : memref<1x1x128xf32, #tpu.memory_space<vmem>>, vector<1x1x128xf32>,
    } else {
    }
    return
  }
  func.func @transform_0(%arg0: i32, %arg1: i32, %arg2: i32) -> (i32, i32, i32) {
    %c1_i32 = arith.constant 1 : i32
    %0 = arith.muli %arg1, %c1_i32 : i32
    %1 = arith.addi %0, %arg2 : i32
    %c0_i32 = arith.constant 0 : i32
    %c0_i32_0 = arith.constant 0 : i32
    return %arg0, %c0_i32, %1 : i32, i32, i32
  }
  func.func @transform_1(%arg0: i32, %arg1: i32, %arg2: i32) -> (i32, i32, i32) {
    %c1_i32 = arith.constant 1 : i32
    %0 = arith.muli %arg1, %c1_i32 : i32
    %1 = arith.addi %0, %arg2 : i32
    %c0_i32 = arith.constant 0 : i32
    %c0_i32_0 = arith.constant 0 : i32
    return %arg0, %c0_i32, %1 : i32, i32, i32
  }
  func.func @transform_2(%arg0: i32, %arg1: i32, %arg2: i32) -> (i32, i32, i32) {
    %c1_i32 = arith.constant 1 : i32
    %0 = arith.muli %arg0, %c1_i32 : i32
    %1 = arith.addi %0, %arg1 : i32
    %c0_i32 = arith.constant 0 : i32
    %c0_i32_0 = arith.constant 0 : i32
    %c0_i32_1 = arith.constant 0 : i32
    return %1, %c0_i32, %c0_i32_0 : i32, i32, i32
  }
  func.func @transform_3(%arg0: i32, %arg1: i32, %arg2: i32) -> (i32, i32, i32) {
    %c1_i32 = arith.constant 1 : i32
    %0 = arith.muli %arg0, %c1_i32 : i32
    %1 = arith.addi %0, %arg1 : i32
    %c0_i32 = arith.constant 0 : i32
    %c0_i32_0 = arith.constant 0 : i32
    %c0_i32_1 = arith.constant 0 : i32
    return %1, %c0_i32, %c0_i32_0 : i32, i32, i32
  }
}

</mosaic_0001>

<llo_original>
// kernel: dice_loss.1
$region0: #{dice_loss.1}
  #allocation0 [shape = 'u32[]', space=smem, size = 0x4, offset = 0x4, fixed_abs, tag = 'smem constant byte address 0x4 - core index']
  #allocation1 [shape = 'u32[144,128]{1,0:T(1,128)}', space=vmem, size = 0x12000, scoped, tag = 'internal scratch']
  #allocation2 [shape = 'f32[2]{0:T(128)}', space=smem, size = 0x200, scoped, tag = 'scratch operand']
  %s0 = inlined_call_operand.vmem [shape: f32[2,4,256], index: 0, kind: input, shape index: {}]
  %s1 = inlined_call_operand.vmem [shape: s32[2,1,256], index: 1, kind: input, shape index: {}]
  %s2 = inlined_call_operand.vmem [shape: f32[2,1,128], index: 2, kind: output, shape index: {0}]
  %s3 = inlined_call_operand.vmem [shape: f32[2,1,128], index: 3, kind: output, shape index: {1}]
  %4 = xla_tuple %s2, %s3
  %s5 = sld [smem:[#allocation0]]
  $region57: #{dice_loss.1} parent=0
    _
  %s7 = ssub.s32 1, %s5
  %s8 = scalar_select 0, %s7, %s5
  loop: start=0, step=1, limit=4
  $region2: #{dice_loss.1} parent=0 // loop_pre_header
    _
  $region3: #{dice_loss.1} parent=0 // loop_header
    %s10 = sphi 0, %s14
    %p11 = scmp.ge.s32.totalorder %s10, 4
    %s17 = sphi 0, %s36
    %s18 = sphi 0, %s32
    %s19 = sphi 0, %s28
    %s20 = sphi 0, %s17
    %s21 = sphi 0, %s18
    %s22 = sphi 0, %s19
    %s23 = sphi 0, %s20
    %s24 = sphi 0, %s21
    %s25 = sphi 0, %s22
    %s43 = sphi 0, %s45
    %s46 = sphi 0, %s43
    %s47 = sphi 0, %s46
    %s63 = sphi 0, %s47
    %s73 = sphi 0, %s75
    %s76 = sphi 0, %s73
    %s77 = sphi 0, %s76
    %s93 = sphi 0, %s77
    %s101 = sphi 0, %s103
    %s104 = sphi 0, %s101
    %s105 = sphi 0, %s104
    %s121 = sphi 0, %s105
    %s129 = sphi 0, %s131
    %s132 = sphi 0, %s129
    %s133 = sphi 0, %s132
    %s149 = sphi 0, %s133
  $region4: #{dice_loss.1} parent=0 // loop_header_branch
    %13 = sbr.rel (%p11) target = $region8
  $region5: #{dice_loss.1} parent=0 // loop_body
    %s15 = ssub.s32 %s10, 1
    %s16 = ssub.s32 %s10, 2
    %s26 = sadd.s32 1, %s19
    %p27 = scmp.ge.s32.totalorder %s26, 1
    %s28 = scalar_select %p27, 0, %s26
    %s29 = sadd.s32 1, %s18
    %s30 = scalar_select %p27, %s29, %s18
    %p31 = scmp.ge.s32.totalorder %s30, 1
    %s32 = scalar_select %p31, 0, %s30
    %s33 = sadd.s32 1, %s17
    %s34 = scalar_select %p31, %s33, %s17
    %p35 = scmp.ge.s32.totalorder %s34, 2
    %s36 = scalar_select %p35, 0, %s34
    %s37 = sadd.s32 %s18, %s19
    %s38 = sadd.s32 %s32, %s28
    %s39 = ssub.s32 %s17, %s36
    %s40 = ssub.s32 %s37, %s38
    %s41 = sor.u32 %s39, %s40
    %p42 = scmp.eq.s32.totalorder %s41, 0
    %s44 = sadd.s32 %s43, 1
    %s45 = scalar_select %p42, %s43, %s44
    %p48 = pneg %p42
    %p49 = scmp.eq.s32.totalorder %s10, 1
    %p50 = por %p48, %p49
    %p51 = scmp.ne.s32.totalorder %s43, %s46
    %p52 = scmp.eq.s32.totalorder %s10, 0
    %p53 = por %p51, %p52
    %p54 = scmp.ne.s32.totalorder %s43, %s46
    %p55 = scmp.eq.s32.totalorder %s15, 1
    %p56 = por %p54, %p55
    %p57 = scmp.ne.s32.totalorder %s46, %s47
    %p58 = scmp.eq.s32.totalorder %s15, 0
    %p59 = por %p57, %p58
    %p60 = scmp.ne.s32.totalorder %s46, %s47
    %p61 = scmp.eq.s32.totalorder %s16, 1
    %p62 = por %p60, %p61
    %p64 = scmp.ne.s32.totalorder %s47, %s63
    %p65 = scmp.eq.s32.totalorder %s16, 0
    %p66 = por %p64, %p65
    %s67 = sadd.s32 %s18, %s19
    %s68 = sadd.s32 %s32, %s28
    %s69 = ssub.s32 %s17, %s36
    %s70 = ssub.s32 %s67, %s68
    %s71 = sor.u32 %s69, %s70
    %p72 = scmp.eq.s32.totalorder %s71, 0
    %s74 = sadd.s32 %s73, 1
    %s75 = scalar_select %p72, %s73, %s74
    %p78 = pneg %p72
    %p79 = scmp.eq.s32.totalorder %s10, 1
    %p80 = por %p78, %p79
    %p81 = scmp.ne.s32.totalorder %s73, %s76
    %p82 = scmp.eq.s32.totalorder %s10, 0
    %p83 = por %p81, %p82
    %p84 = scmp.ne.s32.totalorder %s73, %s76
    %p85 = scmp.eq.s32.totalorder %s15, 1
    %p86 = por %p84, %p85
    %p87 = scmp.ne.s32.totalorder %s76, %s77
    %p88 = scmp.eq.s32.totalorder %s15, 0
    %p89 = por %p87, %p88
    %p90 = scmp.ne.s32.totalorder %s76, %s77
    %p91 = scmp.eq.s32.totalorder %s16, 1
    %p92 = por %p90, %p91
    %p94 = scmp.ne.s32.totalorder %s77, %s93
    %p95 = scmp.eq.s32.totalorder %s16, 0
    %p96 = por %p94, %p95
    %s97 = sadd.s32 %s17, %s18
    %s98 = sadd.s32 %s36, %s32
    %s99 = ssub.s32 %s97, %s98
    %p100 = scmp.eq.s32.totalorder %s99, 0
    %s102 = sadd.s32 %s101, 1
    %s103 = scalar_select %p100, %s101, %s102
    %p106 = pneg %p100
    %p107 = scmp.eq.s32.totalorder %s10, 1
    %p108 = por %p106, %p107
    %p109 = scmp.ne.s32.totalorder %s101, %s104
    %p110 = scmp.eq.s32.totalorder %s10, 0
    %p111 = por %p109, %p110
    %p112 = scmp.ne.s32.totalorder %s101, %s104
    %p113 = scmp.eq.s32.totalorder %s15, 1
    %p114 = por %p112, %p113
    %p115 = scmp.ne.s32.totalorder %s104, %s105
    %p116 = scmp.eq.s32.totalorder %s15, 0
    %p117 = por %p115, %p116
    %p118 = scmp.ne.s32.totalorder %s104, %s105
    %p119 = scmp.eq.s32.totalorder %s16, 1
    %p120 = por %p118, %p119
    %p122 = scmp.ne.s32.totalorder %s105, %s121
    %p123 = scmp.eq.s32.totalorder %s16, 0
    %p124 = por %p122, %p123
    %s125 = sadd.s32 %s17, %s18
    %s126 = sadd.s32 %s36, %s32
    %s127 = ssub.s32 %s125, %s126
    %p128 = scmp.eq.s32.totalorder %s127, 0
    %s130 = sadd.s32 %s129, 1
    %s131 = scalar_select %p128, %s129, %s130
    %p134 = pneg %p128
    %p135 = scmp.eq.s32.totalorder %s10, 1
    %p136 = por %p134, %p135
    %p137 = scmp.ne.s32.totalorder %s129, %s132
    %p138 = scmp.eq.s32.totalorder %s10, 0
    %p139 = por %p137, %p138
    %p140 = scmp.ne.s32.totalorder %s129, %s132
    %p141 = scmp.eq.s32.totalorder %s15, 1
    %p142 = por %p140, %p141
    %p143 = scmp.ne.s32.totalorder %s132, %s133
    %p144 = scmp.eq.s32.totalorder %s15, 0
    %p145 = por %p143, %p144
    %p146 = scmp.ne.s32.totalorder %s132, %s133
    %p147 = scmp.eq.s32.totalorder %s16, 1
    %p148 = por %p146, %p147
    %p150 = scmp.ne.s32.totalorder %s133, %s149
    %p151 = scmp.eq.s32.totalorder %s16, 0
    %p152 = por %p150, %p151
    %p153 = scmp.le.s32.totalorder 1, %s10
    %p154 = scmp.lt.s32.totalorder %s10, 3
    %p155 = pnand %p153, %p154
    %p156 = pneg %p155
    // Predicated region
    $region9: #{dice_loss.1} parent=5 // pred_check
      _
    $region10: #{dice_loss.1} parent=5 // pred_check_branch
      %158 = sbr.rel (%p155) target = $region12
    $region11: #{dice_loss.1} parent=5 // pred_region
      %s159 = ssub.s32 %s10, 1
    $region12: #{dice_loss.1} parent=5 // pred_fallthru
      _
    %p160 = scmp.lt.s32.totalorder %s10, 2
    // Predicated region
    $region13: #{dice_loss.1} parent=5 // pred_check
      %p161 = pneg %p160
    $region14: #{dice_loss.1} parent=5 // pred_check_branch
      %163 = sbr.rel (%p161) target = $region16
    $region15: #{dice_loss.1} parent=5 // pred_region
      // Predicated region
      $region17: #{dice_loss.1} parent=15 // pred_check
        %p164 = pneg %p53
      $region18: #{dice_loss.1} parent=15 // pred_check_branch
        %166 = sbr.rel (%p164) target = $region20
      $region19: #{dice_loss.1} parent=15 // pred_region
        %s167 = sadd.s32 %s18, %s19
        %s168 = smul.u32 2, %s167
        %p169 = scmp.lt.s32.totalorder %s17, 1
        %s170 = scalar_select %p169, %s17, 1
        %p171 = scmp.lt.s32.totalorder %s168, 1
        %s172 = scalar_select %p171, %s168, 1
        %s173 = smul.addr %s170, 2
        %s174 = sadd.s32 %s172, %s173
        %s175 = smul.addr %s174, 4
        %s176 = scalar_lea.vmem %s0, %s175
        %s177 = sadd.s32 %s18, %s19
        %s178 = smul.u32 2, %s177
      $region20: #{dice_loss.1} parent=15 // pred_fallthru
        _
      // Predicated region
      $region21: #{dice_loss.1} parent=15 // pred_check
        %p179 = pneg %p83
      $region22: #{dice_loss.1} parent=15 // pred_check_branch
        %181 = sbr.rel (%p179) target = $region24
      $region23: #{dice_loss.1} parent=15 // pred_region
        %s182 = sadd.s32 %s18, %s19
        %s183 = smul.u32 2, %s182
        %p184 = scmp.lt.s32.totalorder %s17, 1
        %s185 = scalar_select %p184, %s17, 1
        %p186 = scmp.lt.s32.totalorder %s183, 1
        %s187 = scalar_select %p186, %s183, 1
        %s188 = smul.addr %s185, 2
        %s189 = sadd.s32 %s187, %s188
        %s190 = scalar_lea.vmem %s1, %s189
        %s191 = sadd.s32 %s18, %s19
        %s192 = smul.u32 2, %s191
      $region24: #{dice_loss.1} parent=15 // pred_fallthru
        _
    $region16: #{dice_loss.1} parent=5 // pred_fallthru
      _
    %p193 = scmp.le.s32.totalorder 1, %s10
    %p194 = scmp.lt.s32.totalorder %s10, 3
    %p195 = pnand %p193, %p194
    %p196 = pneg %p195
    // Predicated region
    $region25: #{dice_loss.1} parent=5 // pred_check
      _
    $region26: #{dice_loss.1} parent=5 // pred_check_branch
      %198 = sbr.rel (%p195) target = $region28
    $region27: #{dice_loss.1} parent=5 // pred_region
      %s199 = ssub.s32 %s10, 1
      %s200 = sadd.s32 %s21, %s22
      %s201 = smul.u32 2, %s200
      %p202 = scmp.lt.s32.totalorder %s20, 1
      %s203 = scalar_select %p202, %s20, 1
      %p204 = scmp.lt.s32.totalorder %s201, 1
      %s205 = scalar_select %p204, %s201, 1
      %s206 = smul.addr %s203, 2
      %s207 = sadd.s32 %s205, %s206
      %s208 = smul.addr %s207, 4
      %s209 = scalar_lea.vmem %s0, %s208
      %p210 = pneg %p59
      %p211 = pneg %p56
      %s212 = sadd.s32 %s21, %s22
      %s213 = smul.u32 2, %s212
      %p214 = scmp.lt.s32.totalorder %s20, 1
      %s215 = scalar_select %p214, %s20, 1
      %p216 = scmp.lt.s32.totalorder %s213, 1
      %s217 = scalar_select %p216, %s213, 1
      %s218 = smul.addr %s215, 2
      %s219 = sadd.s32 %s217, %s218
      %s220 = scalar_lea.vmem %s1, %s219
      %p221 = pneg %p89
      %p222 = pneg %p86
      %p223 = pneg %p117
      %p224 = pneg %p114
      %s225 = sadd.s32 %s20, %s21
      %p226 = scmp.lt.s32.totalorder %s225, 1
      %s227 = scalar_select %p226, %s225, 1
      %s228 = scalar_lea.vmem %s2, %s227
      %p229 = pneg %p145
      %p230 = pneg %p142
      %s231 = sadd.s32 %s20, %s21
      %p232 = scmp.lt.s32.totalorder %s231, 1
      %s233 = scalar_select %p232, %s231, 1
      %s234 = scalar_lea.vmem %s3, %s233
      %s235 = sadd.s32 %s21, %s22
      %s236 = smul.u32 2, %s235
      %p237 = scmp.lt.s32.totalorder %s20, 1
      %s238 = scalar_select %p237, %s20, 1
      %p239 = scmp.lt.s32.totalorder %s236, 1
      %s240 = scalar_select %p239, %s236, 1
      %s241 = smul.addr %s238, 2
      %s242 = sadd.s32 %s240, %s241
      %s243 = smul.addr %s242, 4
      %s244 = scalar_lea.vmem %s0, %s243
      %s245 = sadd.s32 %s21, %s22
      %s246 = smul.u32 2, %s245
      %s247 = sadd.s32 %s21, %s22
      %s248 = smul.u32 2, %s247
      %p249 = scmp.lt.s32.totalorder %s20, 1
      %s250 = scalar_select %p249, %s20, 1
      %p251 = scmp.lt.s32.totalorder %s248, 1
      %s252 = scalar_select %p251, %s248, 1
      %s253 = smul.addr %s250, 2
      %s254 = sadd.s32 %s252, %s253
      %s255 = scalar_lea.vmem %s1, %s254
      %s256 = sadd.s32 %s21, %s22
      %s257 = smul.u32 2, %s256
      %s258 = sadd.s32 %s20, %s21
      %p259 = scmp.lt.s32.totalorder %s258, 1
      %s260 = scalar_select %p259, %s258, 1
      %s261 = scalar_lea.vmem %s2, %s260
      %s262 = sadd.s32 %s20, %s21
      %s263 = sadd.s32 %s20, %s21
      %p264 = scmp.lt.s32.totalorder %s263, 1
      %s265 = scalar_select %p264, %s263, 1
      %s266 = scalar_lea.vmem %s3, %s265
      %s267 = sadd.s32 %s20, %s21
      %p268 = scmp.eq.s32.totalorder %s22, 0
      // Predicated region
      $region29: #{dice_loss.1} parent=27 // pred_check
        %p269 = pneg %p268
      $region30: #{dice_loss.1} parent=27 // pred_check_branch
        %271 = sbr.rel (%p269) target = $region32
      $region31: #{dice_loss.1} parent=27 // pred_region
        %s272 = scalar_lea.smem [#allocation2], 0
        %273 = sst [smem:[%s272]] 0.0
        %s274 = scalar_lea.smem [#allocation2], 1
        %275 = sst [smem:[%s274]] 0.0
      $region32: #{dice_loss.1} parent=27 // pred_fallthru
        _
      %v276 = vld [vmem:[%s244] sm:$0xff]
      %v277 = vld [vmem:[%s255] sm:$0x3]
      %v279 = vcombine.high %v276, %v276
      %vm281 = vcmask 1043456
      %v282 = vsel %vm281, %v276, -inf
      %v283 = vrot.slane %v282, 4
      %v284 = vmax.f32 %v282, %v283
      %v285 = vrot.slane %v284, 2
      %v286 = vmax.f32 %v284, %v285
      %v287 = vrot.slane %v286, 1
      %v288 = vmax.f32 %v286, %v287
      %v289 = vsel %vm281, %v279, -inf
      %v290 = vrot.slane %v289, 4
      %v291 = vmax.f32 %v289, %v290
      %v292 = vrot.slane %v291, 2
      %v293 = vmax.f32 %v291, %v292
      %v294 = vrot.slane %v293, 1
      %v295 = vmax.f32 %v293, %v294
      %v298 = vcombine.low %v288, %v295
      %v300 = vsub.f32 %v276, %v298
      %v301 = vmul.f32 %v300, 1.442695
      %v302 = vpow.pop %v301
      %v304 = vcombine.high %v302, %v302
      %v306 = vsel %vm281, %v302, 0.0
      %v307 = vrot.slane %v306, 4
      %v308 = vadd.f32 %v306, %v307
      %v309 = vrot.slane %v308, 2
      %v310 = vadd.f32 %v308, %v309
      %v311 = vrot.slane %v310, 1
      %v312 = vadd.f32 %v310, %v311
      %v313 = vsel %vm281, %v304, 0.0
      %v314 = vrot.slane %v313, 4
      %v315 = vadd.f32 %v313, %v314
      %v316 = vrot.slane %v315, 2
      %v317 = vadd.f32 %v315, %v316
      %v318 = vrot.slane %v317, 1
      %v319 = vadd.f32 %v317, %v318
      %v320 = vrcp.pop %v312
      %v321 = vrcp.pop %v319
      %v322 = vmul.f32 %v312, %v320
      %v323 = vmul.f32 %v319, %v321
      %v324 = vsub.f32 2.0, %v322
      %v325 = vsub.f32 2.0, %v323
      %v326 = vmul.f32 %v320, %v324
      %v327 = vmul.f32 %v321, %v325
      %vm328 = vcmp.ne.s32.totalorder %v277, 0
      %v329 = vsel %vm328, 1, 0
      %v330 = vcvt.s32.f32 %v329
      %v331 = vlaneseq
      %v332 = vshrl.u32 %v331, 7
      %v333 = vlaneseq
      %v334 = vshrl.u32 %v333, 7
      %v335 = vsub.s32 0, %v334
      %v336 = vrot.slane %v277, %v335
      %v337 = vlaneseq
      %v338 = vshrl.u32 %v337, 7
      %v339 = vsub.s32 1, %v338
      %v340 = vrot.slane %v277, %v339
      %vm341 = vcmp.eq.s32.totalorder %v332, %v336
      %vm342 = vcmp.eq.s32.totalorder %v332, %v340
      %v343 = vsel %vm341, %v302, 0.0
      %v344 = vsel %vm342, %v304, 0.0
      %v345 = vsel %vm281, %v343, 0.0
      %v346 = vrot.slane %v345, 4
      %v347 = vadd.f32 %v345, %v346
      %v348 = vrot.slane %v347, 2
      %v349 = vadd.f32 %v347, %v348
      %v350 = vrot.slane %v349, 1
      %v351 = vadd.f32 %v349, %v350
      %v352 = vsel %vm281, %v344, 0.0
      %v353 = vrot.slane %v352, 4
      %v354 = vadd.f32 %v352, %v353
      %v355 = vrot.slane %v354, 2
      %v356 = vadd.f32 %v354, %v355
      %v357 = vrot.slane %v356, 1
      %v358 = vadd.f32 %v356, %v357
      %v359 = vmul.f32 %v351, %v326
      %v360 = vmul.f32 %v358, %v327
      %v362 = vlaneseq
      %v363 = vshrl.u32 %v362, 7
      %v364 = vsub.s32 0, %v363
      %v365 = vrot.slane %v330, %v364
      %v366 = vlaneseq
      %v367 = vshrl.u32 %v366, 7
      %v368 = vsub.s32 1, %v367
      %v369 = vrot.slane %v330, %v368
      %v372 = vmul.f32 %v359, %v365
      %v373 = vmul.f32 %v360, %v369
      %vm374 = vcmask 1040384
      %v375 = vsel %vm374, %v372, 0.0
      %v376 = vsel %vm374, %v373, 0.0
      %v377 = vadd.f32 %v375, %v376
      %378 = vadd.xlane.f32.xlu0 %v377
      %v379 = vpop.xlane.xlu0 %378
      %v380 = vrot.slane %v379, 4
      %v381 = vadd.f32 %v379, %v380
      %v382 = vrot.slane %v381, 2
      %v383 = vadd.f32 %v381, %v382
      %v384 = vrot.slane %v383, 1
      %v385 = vadd.f32 %v383, %v384
      %s386 = vtos %v385
      %v389 = vcombine.low %v326, %v327
      %v391 = vmul.f32 %v302, %v389
      %v393 = vlaneseq
      %v394 = vshrl.u32 %v393, 7
      %v395 = vsub.s32 0, %v394
      %v396 = vrot.slane %v391, %v395
      %v397 = vlaneseq
      %v398 = vshrl.u32 %v397, 7
      %v399 = vsub.s32 4, %v398
      %v400 = vrot.slane %v391, %v399
      %v403 = vsel %vm374, %v396, 0.0
      %v404 = vsel %vm374, %v400, 0.0
      %v405 = vadd.f32 %v403, %v404
      %406 = vadd.xlane.f32.xlu0 %v405
      %v407 = vpop.xlane.xlu0 %406
      %v408 = vrot.slane %v407, 4
      %v409 = vadd.f32 %v407, %v408
      %v410 = vrot.slane %v409, 2
      %v411 = vadd.f32 %v409, %v410
      %v412 = vrot.slane %v411, 1
      %v413 = vadd.f32 %v411, %v412
      %s414 = vtos %v413
      %s415 = ssub.f32 256.0, %s414
      %v416 = vsel %vm374, %v365, 0.0
      %v417 = vsel %vm374, %v369, 0.0
      %v418 = vadd.f32 %v416, %v417
      %419 = vadd.xlane.f32.xlu0 %v418
      %v420 = vpop.xlane.xlu0 %419
      %v421 = vrot.slane %v420, 4
      %v422 = vadd.f32 %v420, %v421
      %v423 = vrot.slane %v422, 2
      %v424 = vadd.f32 %v422, %v423
      %v425 = vrot.slane %v424, 1
      %v426 = vadd.f32 %v424, %v425
      %s427 = vtos %v426
      %s428 = sadd.f32 %s415, %s427
      %s429 = sld [smem:[#allocation2]]
      %s430 = sadd.f32 %s429, %s386
      %s431 = scalar_lea.smem [#allocation2], 0
      %432 = sst [smem:[%s431]] %s430
      %s433 = sld [smem:[#allocation2 + $0x1]]
      %s434 = sadd.f32 %s433, %s428
      %s435 = scalar_lea.smem [#allocation2], 1
      %436 = sst [smem:[%s435]] %s434
      // Predicated region
      $region33: #{dice_loss.1} parent=27 // pred_check
        %p437 = pneg %p268
      $region34: #{dice_loss.1} parent=27 // pred_check_branch
        %439 = sbr.rel (%p437) target = $region36
      $region35: #{dice_loss.1} parent=27 // pred_region
        %s440 = sld [smem:[#allocation2]]
        %v441 = vstv %s440
        %442 = vst [vmem:[%s261] sm:$0x1] %v441
        %s443 = sld [smem:[#allocation2 + $0x1]]
        %v444 = vstv %s443
        %445 = vst [vmem:[%s266] sm:$0x1] %v444
      $region36: #{dice_loss.1} parent=27 // pred_fallthru
        _
      %s446 = sadd.s32 %s20, %s21
      %p447 = scmp.lt.s32.totalorder %s446, 1
      %s448 = scalar_select %p447, %s446, 1
      %s449 = scalar_lea.vmem %s2, %s448
      %s450 = sadd.s32 %s20, %s21
      %p451 = scmp.lt.s32.totalorder %s450, 1
      %s452 = scalar_select %p451, %s450, 1
      %s453 = scalar_lea.vmem %s3, %s452
      // Predicated region
      $region37: #{dice_loss.1} parent=27 // pred_check
        %p454 = pneg %p114
      $region38: #{dice_loss.1} parent=27 // pred_check_branch
        %456 = sbr.rel (%p454) target = $region40
      $region39: #{dice_loss.1} parent=27 // pred_region
        %s457 = sadd.s32 %s20, %s21
      $region40: #{dice_loss.1} parent=27 // pred_fallthru
        _
      // Predicated region
      $region41: #{dice_loss.1} parent=27 // pred_check
        %p458 = pneg %p142
      $region42: #{dice_loss.1} parent=27 // pred_check_branch
        %460 = sbr.rel (%p458) target = $region44
      $region43: #{dice_loss.1} parent=27 // pred_region
        %s461 = sadd.s32 %s20, %s21
      $region44: #{dice_loss.1} parent=27 // pred_fallthru
        _
    $region28: #{dice_loss.1} parent=5 // pred_fallthru
      _
    %p462 = scmp.le.s32.totalorder 2, %s10
    // Predicated region
    $region45: #{dice_loss.1} parent=5 // pred_check
      %p463 = pneg %p462
    $region46: #{dice_loss.1} parent=5 // pred_check_branch
      %465 = sbr.rel (%p463) target = $region48
    $region47: #{dice_loss.1} parent=5 // pred_region
      %s466 = ssub.s32 %s10, 2
      // Predicated region
      $region49: #{dice_loss.1} parent=47 // pred_check
        %p467 = pneg %p120
      $region50: #{dice_loss.1} parent=47 // pred_check_branch
        %469 = sbr.rel (%p467) target = $region52
      $region51: #{dice_loss.1} parent=47 // pred_region
        %s470 = sadd.s32 %s23, %s24
        %p471 = scmp.lt.s32.totalorder %s470, 1
        %s472 = scalar_select %p471, %s470, 1
        %s473 = scalar_lea.vmem %s2, %s472
      $region52: #{dice_loss.1} parent=47 // pred_fallthru
        _
      // Predicated region
      $region53: #{dice_loss.1} parent=47 // pred_check
        %p474 = pneg %p148
      $region54: #{dice_loss.1} parent=47 // pred_check_branch
        %476 = sbr.rel (%p474) target = $region56
      $region55: #{dice_loss.1} parent=47 // pred_region
        %s477 = sadd.s32 %s23, %s24
        %p478 = scmp.lt.s32.totalorder %s477, 1
        %s479 = scalar_select %p478, %s477, 1
        %s480 = scalar_lea.vmem %s3, %s479
      $region56: #{dice_loss.1} parent=47 // pred_fallthru
        _
    $region48: #{dice_loss.1} parent=5 // pred_fallthru
      _
  $region6: #{dice_loss.1} parent=0 // loop_footer
    %s14 = sadd.s32 1, %s10
  $region7: #{dice_loss.1} parent=0 // loop_footer_branch
    %9 = sbr.rel target = $region3
  $region8: #{dice_loss.1} parent=0 // loop_exit
    _

</llo_original>
